<compile_context>
chip_gen: v7x
topology: tpu7x:2x2x1
jax: 0.10.0
libtpu: 0.0.40
codegen_flags: <defaults>
</compile_context>

<pallas_src>
import jax
import jax.numpy as jnp
from jax.experimental import pallas as pl
from jax.experimental.pallas import tpu as pltpu

EMB_DIMS = 32
OUT_DIMS = 14
PACK = 8                        # logical rows packed per physical row
PACKED_IN = PACK * EMB_DIMS     # 256
PACKED_OUT = PACK * OUT_DIMS    # 112
DEFAULT_BLOCK_ROWS = 16384      # logical batch rows per grid step


def _round_up(n, m):
    return ((n + m - 1) // m) * m


def _packed_linear_kernel(x_ref, w_ref, b_ref, o_ref):
    # x_ref: [tbp, 256]  w_ref: [256, 112]  b_ref: [1, 112]  o_ref: [tbp, 112]
    y = jnp.dot(x_ref[...], w_ref[...], preferred_element_type=jnp.float32)
    o_ref[...] = (y + b_ref[...]).astype(o_ref.dtype)


def _choose_packed_tile(p_rows, block_rows):
    """Pick the packed-row tile: big enough to amortize per-step overhead,
    small enough to leave >=2 grid steps for v7x megacore when possible."""
    if p_rows <= 8:
        return p_rows                                   # single full block
    desired = max(8, _round_up(block_rows // PACK, 8))
    half = _round_up((p_rows + 1) // 2, 8)              # keep >=2 grid steps
    return max(8, min(desired, half))


def model_classification_forward(x, weight, bias, *, block_rows=DEFAULT_BLOCK_ROWS):
    """y = x @ weight.T + bias with x:[B,32], weight:[14,32], bias:[14] -> y:[B,14]."""
    batch = x.shape[0]
    assert x.shape[1] == EMB_DIMS

    # Pack 8 logical rows per physical row; pad only when B % 8 != 0.
    batch8 = _round_up(batch, PACK)
    if batch8 != batch:
        x = jnp.pad(x, ((0, batch8 - batch), (0, 0)))
    p_rows = batch8 // PACK
    xp = x.reshape(p_rows, PACKED_IN)                   # free contiguous reshape

    # Block-diagonal weight [256,112] and tiled bias [1,112]. These are tiny,
    # VMEM-resident, and are constant-folded if the caller jits over params.
    wt = weight.T.astype(x.dtype)                                   # [32, 14]
    w_block = jnp.kron(jnp.eye(PACK, dtype=wt.dtype), wt)           # [256, 112]
    b_block = jnp.tile(bias.astype(jnp.float32), (PACK,)).reshape(1, PACKED_OUT)

    tbp = _choose_packed_tile(p_rows, block_rows)
    grid = (pl.cdiv(p_rows, tbp),)                      # partial last block OK

    out_dtype = x.dtype
    itemsize = jnp.dtype(out_dtype).itemsize
    cost = pl.CostEstimate(
        flops=2 * batch8 * EMB_DIMS * OUT_DIMS,
        transcendentals=0,
        bytes_accessed=(batch8 * EMB_DIMS + batch8 * OUT_DIMS) * itemsize
        + w_block.size * itemsize
        + PACKED_OUT * 4,
    )

    out = pl.pallas_call(
        _packed_linear_kernel,
        out_shape=jax.ShapeDtypeStruct((p_rows, PACKED_OUT), out_dtype),
        grid=grid,
        in_specs=[
            pl.BlockSpec((tbp, PACKED_IN), lambda i: (i, 0)),         # streamed x
            pl.BlockSpec((PACKED_IN, PACKED_OUT), lambda i: (0, 0)),  # resident W
            pl.BlockSpec((1, PACKED_OUT), lambda i: (0, 0)),          # resident b
        ],
        out_specs=pl.BlockSpec((tbp, PACKED_OUT), lambda i: (i, 0)),
        compiler_params=pltpu.CompilerParams(
            dimension_semantics=("parallel",),
        ),
        cost_estimate=cost,
    )(xp, w_block, b_block)

    y = out.reshape(batch8, OUT_DIMS)                   # free contiguous reshape
    if batch8 != batch:
        y = y[:batch]
    return y


def init_params(key):
    """Deterministic init matching nn.Linear(32, 14) parameter shapes.

    PyTorch stores weight as [out_features, in_features] = [14, 32]; we keep
    that convention (transpose / block-diagonalization handled in the wrapper).
    """
    k_w, k_b = jax.random.split(key)
    bound = 1.0 / jnp.sqrt(float(EMB_DIMS))  # PyTorch Linear default bound
    weight = jax.random.uniform(
        k_w, (OUT_DIMS, EMB_DIMS), dtype=jnp.float32, minval=-bound, maxval=bound
    )
    bias = jax.random.uniform(
        k_b, (OUT_DIMS,), dtype=jnp.float32, minval=-bound, maxval=bound
    )
    return weight, bias


if __name__ == "__main__":
    key = jax.random.PRNGKey(0)
    k_params, k_x1, k_x2 = jax.random.split(key, 3)

    weight, bias = init_params(k_params)  # weight: [14, 32], bias: [14]

    # Small check (single packed row, single grid step).
    batch = 8
    x = jax.random.normal(k_x1, (batch, EMB_DIMS), dtype=jnp.float32)
    y = jax.block_until_ready(model_classification_forward(x, weight, bias))
    y_ref = x @ weight.T + bias
    assert y.shape == (batch, OUT_DIMS)
    assert jnp.allclose(y, y_ref, atol=1e-5, rtol=1e-5)

    # Ragged-batch check: non-multiple-of-8 batch, multi-step grid with a
    # partial last block (300 -> 304 rows -> 38 packed rows, tile 16).
    batch2 = 300
    x2 = jax.random.normal(k_x2, (batch2, EMB_DIMS), dtype=jnp.float32)
    y2 = jax.block_until_ready(
        model_classification_forward(x2, weight, bias, block_rows=128)
    )
    y2_ref = x2 @ weight.T + bias
    assert y2.shape == (batch2, OUT_DIMS)
    assert jnp.allclose(y2, y2_ref, atol=1e-5, rtol=1e-5)

    print("KERNEL_OK")
</pallas_src>

<mosaic_0001>
module attributes {stable_mosaic.version = 11 : i64} {
  func.func @_packed_linear_kernel(%arg0: i32, %arg1: memref<1x256xf32, #tpu.memory_space<vmem>>, %arg2: memref<256x112xf32, #tpu.memory_space<vmem>>, %arg3: memref<1x112xf32, #tpu.memory_space<vmem>>, %arg4: memref<1x112xf32, #tpu.memory_space<vmem>>) attributes {dimension_semantics = [#tpu.dimension_semantics<parallel>], iteration_bounds = array<i64: 1>, scalar_prefetch = 0 : i64, scratch_operands = 0 : i64, tpu.core_type = #tpu.core_type<tc>, window_params = [{transform_indices = @transform_0, window_bounds = array<i64: 1, 256>}, {pipeline_mode = #tpu.pipeline_mode<synchronous>, transform_indices = @transform_1, window_bounds = array<i64: 256, 112>}, {pipeline_mode = #tpu.pipeline_mode<synchronous>, transform_indices = @transform_2, window_bounds = array<i64: 1, 112>}, {transform_indices = @transform_3, window_bounds = array<i64: 1, 112>}]} {
    %c0 = arith.constant 0 : index
    %c0_0 = arith.constant 0 : index
    %0 = vector.load %arg1[%c0, %c0_0] : memref<1x256xf32, #tpu.memory_space<vmem>>, vector<1x256xf32>
    %c0_1 = arith.constant 0 : index
    %c0_2 = arith.constant 0 : index
    %1 = vector.load %arg2[%c0_1, %c0_2] : memref<256x112xf32, #tpu.memory_space<vmem>>, vector<256x112xf32>
    %cst = arith.constant dense<0.000000e+00> : vector<1x112xf32>
    %2 = tpu.matmul %0, %1, %cst {dimension_numbers = #tpu.dot_dimension_numbers<[1], [0], [0], [1], [0, 0, 1, 1], [], []>} : vector<1x256xf32>, vector<256x112xf32>, vector<1x112xf32> -> vector<1x112xf32>
    %c0_3 = arith.constant 0 : index
    %c0_4 = arith.constant 0 : index
    %3 = vector.load %arg3[%c0_3, %c0_4] : memref<1x112xf32, #tpu.memory_space<vmem>>, vector<1x112xf32>
    %4 = arith.addf %2, %3 : vector<1x112xf32>
    %c0_5 = arith.constant 0 : index
    %c0_6 = arith.constant 0 : index
    %5 = vector.load %arg4[%c0_5, %c0_6] : memref<1x112xf32, #tpu.memory_space<vmem>>, vector<1x112xf32>
    tpu.vector_store %arg4[%c0_5, %c0_6], %4 {strides = array<i32>} : memref<1x112xf32, #tpu.memory_space<vmem>>, vector<1x112xf32>,
    return
  }
  func.func @transform_0(%arg0: i32) -> (i32, i32) {
    %c0_i32 = arith.constant 0 : i32
    %c0_i32_0 = arith.constant 0 : i32
    return %arg0, %c0_i32 : i32, i32
  }
  func.func @transform_1(%arg0: i32) -> (i32, i32) {
    %c0_i32 = arith.constant 0 : i32
    %c0_i32_0 = arith.constant 0 : i32
    %c0_i32_1 = arith.constant 0 : i32
    return %c0_i32, %c0_i32_0 : i32, i32
  }
  func.func @transform_2(%arg0: i32) -> (i32, i32) {
    %c0_i32 = arith.constant 0 : i32
    %c0_i32_0 = arith.constant 0 : i32
    %c0_i32_1 = arith.constant 0 : i32
    return %c0_i32, %c0_i32_0 : i32, i32
  }
  func.func @transform_3(%arg0: i32) -> (i32, i32) {
    %c0_i32 = arith.constant 0 : i32
    %c0_i32_0 = arith.constant 0 : i32
    return %arg0, %c0_i32 : i32, i32
  }
}

</mosaic_0001>

<llo_original>
// kernel: tpu_custom_call.1
$region0: #{tpu_custom_call.1}
  #allocation0 [shape = 'u32[]', space=smem, size = 0x4, offset = 0x4, fixed_abs, tag = 'smem constant byte address 0x4 - core index']
  #allocation1 [shape = 'u32[144,128]{1,0:T(1,128)}', space=vmem, size = 0x12000, scoped, tag = 'internal scratch']
  %s0 = inlined_call_operand.vmem [shape: f32[1,256], index: 0, kind: input, shape index: {}]
  %s1 = inlined_call_operand.vmem [shape: f32[256,112], index: 1, kind: input, shape index: {}]
  %s2 = inlined_call_operand.vmem [shape: f32[1,112], index: 2, kind: input, shape index: {}]
  %s3 = inlined_call_operand.hbm [shape: f32[1,112], index: 3, kind: output, shape index: {}]
  %s4 = sld [smem:[#allocation0]]
  $region22: #{tpu_custom_call.1} parent=0
    _
  %s6 = ssub.s32 1, %s4
  %s7 = scalar_select 0, %s6, %s4
  $region1: #{tpu_custom_call.1} parent=0
    #allocation2 [shape = 'u8[512]{0}', space=vmem, size = 0x400, scoped, tag = 'output window, operand 0, single buffered']
    #allocation3 [shape = 's32[1]{0}', space=sflag, size = 0x4, scoped, tag = 'scoped memory for tpu_custom_call.1']
    %8 = vsyncpa [#allocation3], 0
    // Predicated region
    $region2: #{tpu_custom_call.1} parent=1 // pred_check
      _
    $region3: #{tpu_custom_call.1} parent=1 // pred_check_branch
      %10 = sbr.rel (0) target = $region5
    $region4: #{tpu_custom_call.1} parent=1 // pred_region
      _
    $region5: #{tpu_custom_call.1} parent=1 // pred_fallthru
      _
    // Predicated region
    $region6: #{tpu_custom_call.1} parent=1 // pred_check
      _
    $region7: #{tpu_custom_call.1} parent=1 // pred_check_branch
      %12 = sbr.rel (0) target = $region9
    $region8: #{tpu_custom_call.1} parent=1 // pred_region
      _
    $region9: #{tpu_custom_call.1} parent=1 // pred_fallthru
      _
    // Predicated region
    $region10: #{tpu_custom_call.1} parent=1 // pred_check
      _
    $region11: #{tpu_custom_call.1} parent=1 // pred_check_branch
      %14 = sbr.rel (0) target = $region13
    $region12: #{tpu_custom_call.1} parent=1 // pred_region
      _
    $region13: #{tpu_custom_call.1} parent=1 // pred_fallthru
      _
    %v15 = vld [vmem:[%s0] sm:$0x3]
    %v16 = vld [vmem:[%s1] sm:$0xff]
    %v17 = vld [vmem:[%s1 + $0x8] sm:$0xff]
    %v18 = vld [vmem:[%s1 + $0x10] sm:$0xff]
    %v19 = vld [vmem:[%s1 + $0x18] sm:$0xff]
    %v20 = vld [vmem:[%s1 + $0x20] sm:$0xff]
    %v21 = vld [vmem:[%s1 + $0x28] sm:$0xff]
    %v22 = vld [vmem:[%s1 + $0x30] sm:$0xff]
    %v23 = vld [vmem:[%s1 + $0x38] sm:$0xff]
    %v24 = vld [vmem:[%s1 + $0x40] sm:$0xff]
    %v25 = vld [vmem:[%s1 + $0x48] sm:$0xff]
    %v26 = vld [vmem:[%s1 + $0x50] sm:$0xff]
    %v27 = vld [vmem:[%s1 + $0x58] sm:$0xff]
    %v28 = vld [vmem:[%s1 + $0x60] sm:$0xff]
    %v29 = vld [vmem:[%s1 + $0x68] sm:$0xff]
    %v30 = vld [vmem:[%s1 + $0x70] sm:$0xff]
    %v31 = vld [vmem:[%s1 + $0x78] sm:$0xff]
    %v32 = vld [vmem:[%s1 + $0x80] sm:$0xff]
    %v33 = vld [vmem:[%s1 + $0x88] sm:$0xff]
    %v34 = vld [vmem:[%s1 + $0x90] sm:$0xff]
    %v35 = vld [vmem:[%s1 + $0x98] sm:$0xff]
    %v36 = vld [vmem:[%s1 + $0xa0] sm:$0xff]
    %v37 = vld [vmem:[%s1 + $0xa8] sm:$0xff]
    %v38 = vld [vmem:[%s1 + $0xb0] sm:$0xff]
    %v39 = vld [vmem:[%s1 + $0xb8] sm:$0xff]
    %v40 = vld [vmem:[%s1 + $0xc0] sm:$0xff]
    %v41 = vld [vmem:[%s1 + $0xc8] sm:$0xff]
    %v42 = vld [vmem:[%s1 + $0xd0] sm:$0xff]
    %v43 = vld [vmem:[%s1 + $0xd8] sm:$0xff]
    %v44 = vld [vmem:[%s1 + $0xe0] sm:$0xff]
    %v45 = vld [vmem:[%s1 + $0xe8] sm:$0xff]
    %v46 = vld [vmem:[%s1 + $0xf0] sm:$0xff]
    %v47 = vld [vmem:[%s1 + $0xf8] sm:$0xff]
    %v48 = vld [vmem:[%s2] sm:$0x1]
    %v50 = vlaneseq
    %v51 = vshrl.u32 %v50, 7
    %v52 = vsub.s32 0, %v51
    %v53 = vrot.slane %v15, %v52
    %v54 = vlaneseq
    %v55 = vshrl.u32 %v54, 7
    %v56 = vsub.s32 1, %v55
    %v57 = vrot.slane %v15, %v56
    %60 = vmatprep.subr.mxu0 0.0
    %61 = vmatpush1.msra.mxu0 %v16
    %62 = vmatprep.subr.mxu0 0.0
    %63 = vmatpush1.msra.mxu0 %v17
    %64 = vmatprep.subr.mxu0 0.0
    %65 = vmatpush1.msra.mxu0 %v18
    %66 = vmatprep.subr.mxu0 0.0
    %67 = vmatpush1.msra.mxu0 %v19
    %68 = vmatprep.subr.mxu0 0.0
    %69 = vmatpush1.msra.mxu0 %v20
    %70 = vmatprep.subr.mxu0 0.0
    %71 = vmatpush1.msra.mxu0 %v21
    %72 = vmatprep.subr.mxu0 0.0
    %73 = vmatpush1.msra.mxu0 %v22
    %74 = vmatprep.subr.mxu0 0.0
    %75 = vmatpush1.msra.mxu0 %v23
    %76 = vmatprep.subr.mxu0 0.0
    %77 = vmatpush1.msra.mxu0 %v24
    %78 = vmatprep.subr.mxu0 0.0
    %79 = vmatpush1.msra.mxu0 %v25
    %80 = vmatprep.subr.mxu0 0.0
    %81 = vmatpush1.msra.mxu0 %v26
    %82 = vmatprep.subr.mxu0 0.0
    %83 = vmatpush1.msra.mxu0 %v27
    %84 = vmatprep.subr.mxu0 0.0
    %85 = vmatpush1.msra.mxu0 %v28
    %86 = vmatprep.subr.mxu0 0.0
    %87 = vmatpush1.msra.mxu0 %v29
    %88 = vmatprep.subr.mxu0 0.0
    %89 = vmatpush1.msra.mxu0 %v30
    %90 = vmatprep.subr.mxu0 0.0
    %91 = vmatpush1.msra.mxu0 %v31
    %92 = vmatprep.subr.mxu0 0.0
    %93 = vmatpush1.msra.mxu0 %v32
    %94 = vmatprep.subr.mxu0 0.0
    %95 = vmatpush1.msra.mxu0 %v33
    %96 = vmatprep.subr.mxu0 0.0
    %97 = vmatpush1.msra.mxu0 %v34
    %98 = vmatprep.subr.mxu0 0.0
    %99 = vmatpush1.msra.mxu0 %v35
    %100 = vmatprep.subr.mxu0 0.0
    %101 = vmatpush1.msra.mxu0 %v36
    %102 = vmatprep.subr.mxu0 0.0
    %103 = vmatpush1.msra.mxu0 %v37
    %104 = vmatprep.subr.mxu0 0.0
    %105 = vmatpush1.msra.mxu0 %v38
    %106 = vmatprep.subr.mxu0 0.0
    %107 = vmatpush1.msra.mxu0 %v39
    %108 = vmatprep.subr.mxu0 0.0
    %109 = vmatpush1.msra.mxu0 %v40
    %110 = vmatprep.subr.mxu0 0.0
    %111 = vmatpush1.msra.mxu0 %v41
    %112 = vmatprep.subr.mxu0 0.0
    %113 = vmatpush1.msra.mxu0 %v42
    %114 = vmatprep.subr.mxu0 0.0
    %115 = vmatpush1.msra.mxu0 %v43
    %116 = vmatprep.subr.mxu0 0.0
    %117 = vmatpush1.msra.mxu0 %v44
    %118 = vmatprep.subr.mxu0 0.0
    %119 = vmatpush1.msra.mxu0 %v45
    %120 = vmatprep.subr.mxu0 0.0
    %121 = vmatpush1.msra.mxu0 %v46
    %122 = vmatprep.subr.mxu0 0.0
    %123 = vmatpush1.msra.mxu0 %v47
    %124 = vmatprep.mubr.f32.mxu0 %v57
    %125 = vmatmul.mubr.f32.gmra.mrb[0].mxu0 %v53
    %v126 = vpop.f32.mrb[0].mxu0
    %v127 = vadd.f32 %v48, %v126
    %v128 = vpop.f32.mrb[0].mxu0
    %129 = vdwg.mxu0
    %vm130 = vcmask 909312
    %131 = vst.msk [vmem:[#allocation2] sm:$0x1] %vm130, %v127
    // Predicated region
    $region14: #{tpu_custom_call.1} parent=1 // pred_check
      _
    $region15: #{tpu_custom_call.1} parent=1 // pred_check_branch
      %133 = sbr.rel (0) target = $region17
    $region16: #{tpu_custom_call.1} parent=1 // pred_region
      %s135 = ssub.s32 16, 16
      %136 = vsyncadd [#allocation3], %s135
      %s138 = sshll.u32 [#allocation2], 4
      %s139 = int_to_ptr.vmem [resolvable:$true] %s138
      %141 = dma.vmem_to_hbm [thread:$0]  %s139, 16, %s3, [#allocation3]
    $region17: #{tpu_custom_call.1} parent=1 // pred_fallthru
      _
    // Predicated region
    $region18: #{tpu_custom_call.1} parent=1 // pred_check
      _
    $region19: #{tpu_custom_call.1} parent=1 // pred_check_branch
      %143 = sbr.rel (0) target = $region21
    $region20: #{tpu_custom_call.1} parent=1 // pred_region
      %144 = dma.done [#allocation3], 16
    $region21: #{tpu_custom_call.1} parent=1 // pred_fallthru
      _
    %145 = vsyncpa [#allocation3], 1

</llo_original>
